<compile_context>
chip_gen: v6e
topology: v6e:2x2x1
jax: 0.10.0
libtpu: 0.0.40
codegen_flags: <defaults>
</compile_context>

<pallas_src>
import math

import jax
import jax.numpy as jnp
from jax.experimental import pallas as pl
from jax.experimental.pallas import tpu as pltpu


def _pick_tile(n, candidates):
    """Largest/first candidate tile that divides n; falls back to the full dim."""
    for t in candidates:
        if n >= t and n % t == 0:
            return t
    return n


def _vmem_limit(bytes_needed):
    """Explicit scoped-VMEM budget: 2x headroom, >=32 MiB, capped at 64 MiB
    so the same value is legal on v7x (64 MiB physical per TensorCore)."""
    return int(min(max(2 * bytes_needed, 32 << 20), 64 << 20))


# --------------------------------------------------------------------------
# Stage 1: fused Q/K/V projections
# --------------------------------------------------------------------------
def _qkv_proj_kernel(xq_ref, xk_ref, xv_ref,
                     wq_ref, bq_ref, wk_ref, bk_ref, wv_ref, bv_ref,
                     q_out, k_out, v_out):
    def proj(x_ref, w_ref, b_ref, o_ref):
        x = x_ref[...].astype(jnp.bfloat16)          # bf16 MXU inputs
        y = jnp.dot(x, w_ref[...], preferred_element_type=jnp.float32)
        o_ref[...] = (y + b_ref[...]).astype(o_ref.dtype)

    proj(xq_ref, wq_ref, bq_ref, q_out)
    proj(xk_ref, wk_ref, bk_ref, k_out)
    proj(xv_ref, wv_ref, bv_ref, v_out)


# --------------------------------------------------------------------------
# Stage 2: flash-style causal attention + fused output projection
# --------------------------------------------------------------------------
def _flash_attn_kernel(q_ref, k_ref, v_ref, wo_ref, bo_ref, o_ref,
                       m_sc, l_sc, acc_sc):
    # Block shapes:
    #   q_ref : (1, H, tq, hd) bf16 (Q pre-scaled by 1/sqrt(hd) in stage 1)
    #   k_ref / v_ref : (1, H, tk, hd) bf16
    #   wo_ref: (H, hd, D) bf16        bo_ref: (1, D) f32
    #   o_ref : (1, tq, D)             m_sc / l_sc: (H, tq) f32
    #   acc_sc: (H, tq, hd) f32
    _, n_head, tq, hd = q_ref.shape
    tk = k_ref.shape[2]

    qi = pl.program_id(1)
    ki = pl.program_id(2)
    n_kv = pl.num_programs(2)

    q_first = qi * tq
    q_last = q_first + (tq - 1)
    kv_first = ki * tk
    kv_last = kv_first + (tk - 1)

    @pl.when(ki == 0)
    def _init():
        m_sc[...] = jnp.full(m_sc.shape, -jnp.inf, dtype=m_sc.dtype)
        l_sc[...] = jnp.zeros(l_sc.shape, dtype=l_sc.dtype)
        acc_sc[...] = jnp.zeros(acc_sc.shape, dtype=acc_sc.dtype)

    def update(apply_mask):
        q = q_ref[0]                                  # (H, tq, hd) bf16
        k = k_ref[0]
        v = v_ref[0]

        # Head-batched QK^T: one batched MXU contraction instead of H tiny ones.
        s = jnp.einsum("hqd,hkd->hqk", q, k,
                       preferred_element_type=jnp.float32)

        if apply_mask:
            # Only the diagonal-straddling block pays for the causal mask,
            # built from 2-D iotas and broadcast over heads (same -10000 fill
            # as the PyTorch module).
            q_pos = q_first + jax.lax.broadcasted_iota(jnp.int32, (tq, tk), 0)
            kv_pos = kv_first + jax.lax.broadcasted_iota(jnp.int32, (tq, tk), 1)
            s = jnp.where((q_pos >= kv_pos)[None, :, :], s, -10000.0)

        # Online softmax (all elementwise math in f32); m/l are lane-dense.
        m_prev = m_sc[...]                            # (H, tq)
        m_new = jnp.maximum(m_prev, s.max(axis=-1))   # (H, tq)
        alpha = jnp.exp(m_prev - m_new)
        p = jnp.exp(s - m_new[..., None])             # (H, tq, tk)
        l_sc[...] = alpha * l_sc[...] + p.sum(axis=-1)
        acc_sc[...] = alpha[..., None] * acc_sc[...] + jnp.einsum(
            "hqk,hkd->hqd", p.astype(v.dtype), v,
            preferred_element_type=jnp.float32)
        m_sc[...] = m_new

    # KV block fully below the diagonal: no mask work at all.
    @pl.when(kv_last <= q_first)
    def _interior():
        update(apply_mask=False)

    # KV block straddling the diagonal: masked update.
    @pl.when(jnp.logical_and(kv_first <= q_last, kv_last > q_first))
    def _diagonal():
        update(apply_mask=True)

    # KV blocks fully ABOVE the diagonal run neither branch; their K/V blocks
    # were never DMA'd either (kv BlockSpec index is clamped to the diagonal).

    @pl.when(ki == n_kv - 1)
    def _finalize():
        # Exact reciprocal: finalize runs once per (b, q-tile), approx saves nothing.
        inv_l = pl.reciprocal(l_sc[...], approx=False)           # (H, tq)
        acc = acc_sc[...] * inv_l[..., None]                     # (H, tq, hd) f32
        # Fused output projection: one head-batched matmul + head-sum
        # (no concatenate of hd-wide slices, no serial chain of per-head adds).
        parts = jnp.einsum("hqd,hdn->hqn", acc.astype(jnp.bfloat16), wo_ref[...],
                           preferred_element_type=jnp.float32)   # (H, tq, D)
        out = parts.sum(axis=0) + bo_ref[...]                    # (tq, D)
        o_ref[0] = out.astype(o_ref.dtype)


# --------------------------------------------------------------------------
# Wrapper
# --------------------------------------------------------------------------
def multi_head_attention_pallas(q, k, v, params, n_head):
    """q, k, v: (B, T, D) f32.  params: transposed weights + biases (f32)."""
    B, T, D = q.shape
    assert D % n_head == 0
    hd = D // n_head
    inv_sqrt = 1.0 / math.sqrt(hd)

    # bf16 weights for the MXU (f32 accumulation inside the kernels).
    # 1/sqrt(hd) is folded into the Q projection: one tiny op on weights here
    # removes a per-kv-step (H, tq, tk) multiply from the attention kernel.
    wq = (params["wq_t"] * inv_sqrt).astype(jnp.bfloat16)
    bq = params["bq"] * inv_sqrt
    wk = params["wk_t"].astype(jnp.bfloat16)
    wv = params["wv_t"].astype(jnp.bfloat16)
    bk, bv = params["bk"], params["bv"]
    # Per-head weight slabs for the fused output projection (free reshape).
    wo = params["wo_t"].astype(jnp.bfloat16).reshape(n_head, hd, D)
    bo = params["bo"]

    # ---- Stage 1: fused Q/K/V projections over (row, col) tiles ----
    rows = B * T
    tm = _pick_tile(rows, (512, 256, 128))
    # Keep all three weights resident only when they comfortably fit VMEM
    # (double-buffered); otherwise stream output-column tiles so the pipeline
    # stays legal on v7x's 64 MiB VMEM.  Column axis is innermost, so the
    # x row-tile stays resident across column steps (no extra activation DMA).
    if 2 * 3 * D * D * 2 <= (24 << 20):
        tn = D
    else:
        tn = _pick_tile(D, (512, 256, 128))

    xq = q.reshape(rows, D)
    xk = k.reshape(rows, D)
    xv = v.reshape(rows, D)

    x_spec = pl.BlockSpec((tm, D), lambda i, j: (i, 0))
    w_spec = pl.BlockSpec((D, tn), lambda i, j: (0, j))
    b_spec = pl.BlockSpec((1, tn), lambda i, j: (0, j))
    o_spec1 = pl.BlockSpec((tm, tn), lambda i, j: (i, j))

    st1_bytes = 2 * (3 * tm * D * 4        # x blocks (f32, double-buffered)
                     + 3 * D * tn * 2      # weight blocks (bf16)
                     + 3 * 8 * tn * 4      # bias blocks (padded)
                     + 3 * tm * tn * 2)    # output blocks (bf16)

    proj_out = jax.ShapeDtypeStruct((rows, D), jnp.bfloat16)
    qf, kf, vf = pl.pallas_call(
        _qkv_proj_kernel,
        out_shape=(proj_out, proj_out, proj_out),
        grid_spec=pltpu.PrefetchScalarGridSpec(
            num_scalar_prefetch=0,
            grid=(rows // tm, D // tn),
            in_specs=[x_spec, x_spec, x_spec,
                      w_spec, b_spec, w_spec, b_spec, w_spec, b_spec],
            out_specs=(o_spec1, o_spec1, o_spec1),
        ),
        compiler_params=pltpu.CompilerParams(
            dimension_semantics=("parallel", "parallel"),
            vmem_limit_bytes=_vmem_limit(st1_bytes)),
    )(xq, xk, xv, wq, bq, wk, bk, wv, bv)

    # ---- Head split (B, T, D) -> (B, H, T, hd): one XLA layout pass on bf16 ----
    # TODO(synk): emitting stage-1 outputs directly head-major would delete this
    # HBM round trip, but requires an in-kernel (tm, D)->(H, tm, hd) relayout or
    # per-head weight-column streaming; kept as a cheap bf16 XLA pass for now.
    def to_heads(x):
        return x.reshape(B, T, n_head, hd).transpose(0, 2, 1, 3)  # (B, H, T, hd)

    qh, kh, vh = to_heads(qf), to_heads(kf), to_heads(vf)

    # ---- Stage 2: flash attention + fused output projection ----
    tq = _pick_tile(T, (128, 256))   # 128 preferred: fits v5e MXU N and v7x VMEM
    tk = tq
    grid = (B, T // tq, T // tk)

    q_spec = pl.BlockSpec((1, n_head, tq, hd), lambda b, qi, ki: (b, 0, qi, 0))

    def kv_index_map(b, qi, ki):
        # Clamp to the diagonal block for this q tile: KV blocks strictly above
        # the causal diagonal reuse the previous block index, so Pallas issues
        # no DMA for them (their compute is skipped inside the kernel too).
        diag = (qi * tq + (tq - 1)) // tk
        return (b, 0, jnp.minimum(ki, diag), 0)

    kv_spec = pl.BlockSpec((1, n_head, tk, hd), kv_index_map)
    wo_spec = pl.BlockSpec((n_head, hd, D), lambda b, qi, ki: (0, 0, 0))
    bo_spec = pl.BlockSpec((1, D), lambda b, qi, ki: (0, 0))
    o_spec = pl.BlockSpec((1, tq, D), lambda b, qi, ki: (b, qi, 0))

    st2_bytes = (2 * (n_head * tq * hd * 2          # q block
                      + 2 * n_head * tk * hd * 2    # k, v blocks
                      + n_head * hd * D * 2         # wo
                      + 8 * D * 4                   # bo (padded)
                      + tq * D * 4)                 # output block
                 + 2 * n_head * tq * 4              # m, l scratch
                 + n_head * tq * hd * 4             # acc scratch
                 + 3 * n_head * tq * tk * 4)        # score intermediates headroom

    # Output kept in q.dtype (f32) to match the PyTorch module semantics;
    # switch to bf16 if the consumer accepts it (halves the final writeback).
    return pl.pallas_call(
        _flash_attn_kernel,
        out_shape=jax.ShapeDtypeStruct((B, T, D), q.dtype),
        grid_spec=pltpu.PrefetchScalarGridSpec(
            num_scalar_prefetch=0,
            grid=grid,
            in_specs=[q_spec, kv_spec, kv_spec, wo_spec, bo_spec],
            out_specs=o_spec,
            scratch_shapes=[
                pltpu.VMEM((n_head, tq), jnp.float32),      # running max  m
                pltpu.VMEM((n_head, tq), jnp.float32),      # running sum  l
                pltpu.VMEM((n_head, tq, hd), jnp.float32),  # running numerator
            ],
        ),
        compiler_params=pltpu.CompilerParams(
            dimension_semantics=("parallel", "parallel", "arbitrary"),
            vmem_limit_bytes=_vmem_limit(st2_bytes)),
    )(qh, kh, vh, wo, bo)


# --------------------------------------------------------------------------
# Pure-JAX reference (matches the PyTorch module, f32)
# --------------------------------------------------------------------------
def _reference(q, k, v, params, n_head):
    B, T, D = q.shape
    hd = D // n_head
    Q = q @ params["wq_t"] + params["bq"]
    K = k @ params["wk_t"] + params["bk"]
    V = v @ params["wv_t"] + params["bv"]
    Q = Q.reshape(B, T, n_head, hd).transpose(0, 2, 1, 3)
    K = K.reshape(B, T, n_head, hd).transpose(0, 2, 1, 3)
    V = V.reshape(B, T, n_head, hd).transpose(0, 2, 1, 3)
    score = jnp.einsum("bhqd,bhkd->bhqk", Q, K) / math.sqrt(hd)
    mask = jnp.tril(jnp.ones((T, T), dtype=bool))
    score = jnp.where(mask, score, -10000.0)
    score = jax.nn.softmax(score, axis=-1)
    out = jnp.einsum("bhqk,bhkd->bhqd", score, V)
    out = out.transpose(0, 2, 1, 3).reshape(B, T, D)
    return out @ params["wo_t"] + params["bo"]


if __name__ == "__main__":
    B, T, D, n_head = 2, 8, 32, 4

    key = jax.random.PRNGKey(0)
    keys = jax.random.split(key, 11)

    q = jax.random.normal(keys[0], (B, T, D), dtype=jnp.float32)
    k = jax.random.normal(keys[1], (B, T, D), dtype=jnp.float32)
    v = jax.random.normal(keys[2], (B, T, D), dtype=jnp.float32)

    bound = 1.0 / math.sqrt(D)

    def u(kk, shape):
        return jax.random.uniform(kk, shape, minval=-bound, maxval=bound,
                                  dtype=jnp.float32)

    params = {
        "wq_t": u(keys[3], (D, D)), "bq": u(keys[4], (1, D)),
        "wk_t": u(keys[5], (D, D)), "bk": u(keys[6], (1, D)),
        "wv_t": u(keys[7], (D, D)), "bv": u(keys[8], (1, D)),
        "wo_t": u(keys[9], (D, D)), "bo": u(keys[10], (1, D)),
    }

    out = multi_head_attention_pallas(q, k, v, params, n_head)
    out = jax.block_until_ready(out)

    ref = _reference(q, k, v, params, n_head)
    assert out.shape == (B, T, D)
    # bf16 MXU inputs with f32 accumulation -> bf16-appropriate tolerance vs f32 ref.
    assert jnp.allclose(out, ref, atol=5e-2, rtol=5e-2), "mismatch vs reference"

    print("KERNEL_OK")
</pallas_src>

<mosaic_0001>
module attributes {stable_mosaic.version = 11 : i64} {
  func.func @_qkv_proj_kernel(%arg0: i32, %arg1: i32, %arg2: memref<16x32xf32, #tpu.memory_space<vmem>>, %arg3: memref<16x32xf32, #tpu.memory_space<vmem>>, %arg4: memref<16x32xf32, #tpu.memory_space<vmem>>, %arg5: memref<32x32xbf16, #tpu.memory_space<vmem>>, %arg6: memref<1x32xf32, #tpu.memory_space<vmem>>, %arg7: memref<32x32xbf16, #tpu.memory_space<vmem>>, %arg8: memref<1x32xf32, #tpu.memory_space<vmem>>, %arg9: memref<32x32xbf16, #tpu.memory_space<vmem>>, %arg10: memref<1x32xf32, #tpu.memory_space<vmem>>, %arg11: memref<16x32xbf16, #tpu.memory_space<vmem>>, %arg12: memref<16x32xbf16, #tpu.memory_space<vmem>>, %arg13: memref<16x32xbf16, #tpu.memory_space<vmem>>) attributes {dimension_semantics = [#tpu.dimension_semantics<parallel>, #tpu.dimension_semantics<parallel>], iteration_bounds = array<i64: 1, 1>, scalar_prefetch = 0 : i64, scratch_operands = 0 : i64, tpu.core_type = #tpu.core_type<tc>, window_params = [{transform_indices = @transform_0, window_bounds = array<i64: 16, 32>}, {transform_indices = @transform_1, window_bounds = array<i64: 16, 32>}, {transform_indices = @transform_2, window_bounds = array<i64: 16, 32>}, {transform_indices = @transform_3, window_bounds = array<i64: 32, 32>}, {transform_indices = @transform_4, window_bounds = array<i64: 1, 32>}, {transform_indices = @transform_5, window_bounds = array<i64: 32, 32>}, {transform_indices = @transform_6, window_bounds = array<i64: 1, 32>}, {transform_indices = @transform_7, window_bounds = array<i64: 32, 32>}, {transform_indices = @transform_8, window_bounds = array<i64: 1, 32>}, {transform_indices = @transform_9, window_bounds = array<i64: 16, 32>}, {transform_indices = @transform_10, window_bounds = array<i64: 16, 32>}, {transform_indices = @transform_11, window_bounds = array<i64: 16, 32>}]} {
    %c0 = arith.constant 0 : index
    %c0_0 = arith.constant 0 : index
    %0 = vector.load %arg2[%c0, %c0_0] : memref<16x32xf32, #tpu.memory_space<vmem>>, vector<16x32xf32>
    %1 = arith.truncf %0 : vector<16x32xf32> to vector<16x32xbf16>
    %c0_1 = arith.constant 0 : index
    %c0_2 = arith.constant 0 : index
    %2 = vector.load %arg5[%c0_1, %c0_2] : memref<32x32xbf16, #tpu.memory_space<vmem>>, vector<32x32xbf16>
    %cst = arith.constant dense<0.000000e+00> : vector<16x32xf32>
    %3 = tpu.matmul %1, %2, %cst {dimension_numbers = #tpu.dot_dimension_numbers<[1], [0], [0], [1], [0, 0, 1, 1], [], []>} : vector<16x32xbf16>, vector<32x32xbf16>, vector<16x32xf32> -> vector<16x32xf32>
    %c0_3 = arith.constant 0 : index
    %c0_4 = arith.constant 0 : index
    %4 = vector.load %arg6[%c0_3, %c0_4] : memref<1x32xf32, #tpu.memory_space<vmem>>, vector<1x32xf32>
    %5 = vector.broadcast %4 : vector<1x32xf32> to vector<16x32xf32>
    %6 = arith.addf %3, %5 : vector<16x32xf32>
    %7 = arith.truncf %6 : vector<16x32xf32> to vector<16x32xbf16>
    %c0_5 = arith.constant 0 : index
    %c0_6 = arith.constant 0 : index
    %8 = vector.load %arg11[%c0_5, %c0_6] : memref<16x32xbf16, #tpu.memory_space<vmem>>, vector<16x32xbf16>
    tpu.vector_store %arg11[%c0_5, %c0_6], %7 {strides = array<i32>} : memref<16x32xbf16, #tpu.memory_space<vmem>>, vector<16x32xbf16>,
    %c0_7 = arith.constant 0 : index
    %c0_8 = arith.constant 0 : index
    %9 = vector.load %arg3[%c0_7, %c0_8] : memref<16x32xf32, #tpu.memory_space<vmem>>, vector<16x32xf32>
    %10 = arith.truncf %9 : vector<16x32xf32> to vector<16x32xbf16>
    %c0_9 = arith.constant 0 : index
    %c0_10 = arith.constant 0 : index
    %11 = vector.load %arg7[%c0_9, %c0_10] : memref<32x32xbf16, #tpu.memory_space<vmem>>, vector<32x32xbf16>
    %cst_11 = arith.constant dense<0.000000e+00> : vector<16x32xf32>
    %12 = tpu.matmul %10, %11, %cst_11 {dimension_numbers = #tpu.dot_dimension_numbers<[1], [0], [0], [1], [0, 0, 1, 1], [], []>} : vector<16x32xbf16>, vector<32x32xbf16>, vector<16x32xf32> -> vector<16x32xf32>
    %c0_12 = arith.constant 0 : index
    %c0_13 = arith.constant 0 : index
    %13 = vector.load %arg8[%c0_12, %c0_13] : memref<1x32xf32, #tpu.memory_space<vmem>>, vector<1x32xf32>
    %14 = vector.broadcast %13 : vector<1x32xf32> to vector<16x32xf32>
    %15 = arith.addf %12, %14 : vector<16x32xf32>
    %16 = arith.truncf %15 : vector<16x32xf32> to vector<16x32xbf16>
    %c0_14 = arith.constant 0 : index
    %c0_15 = arith.constant 0 : index
    %17 = vector.load %arg12[%c0_14, %c0_15] : memref<16x32xbf16, #tpu.memory_space<vmem>>, vector<16x32xbf16>
    tpu.vector_store %arg12[%c0_14, %c0_15], %16 {strides = array<i32>} : memref<16x32xbf16, #tpu.memory_space<vmem>>, vector<16x32xbf16>,
    %c0_16 = arith.constant 0 : index
    %c0_17 = arith.constant 0 : index
    %18 = vector.load %arg4[%c0_16, %c0_17] : memref<16x32xf32, #tpu.memory_space<vmem>>, vector<16x32xf32>
    %19 = arith.truncf %18 : vector<16x32xf32> to vector<16x32xbf16>
    %c0_18 = arith.constant 0 : index
    %c0_19 = arith.constant 0 : index
    %20 = vector.load %arg9[%c0_18, %c0_19] : memref<32x32xbf16, #tpu.memory_space<vmem>>, vector<32x32xbf16>
    %cst_20 = arith.constant dense<0.000000e+00> : vector<16x32xf32>
    %21 = tpu.matmul %19, %20, %cst_20 {dimension_numbers = #tpu.dot_dimension_numbers<[1], [0], [0], [1], [0, 0, 1, 1], [], []>} : vector<16x32xbf16>, vector<32x32xbf16>, vector<16x32xf32> -> vector<16x32xf32>
    %c0_21 = arith.constant 0 : index
    %c0_22 = arith.constant 0 : index
    %22 = vector.load %arg10[%c0_21, %c0_22] : memref<1x32xf32, #tpu.memory_space<vmem>>, vector<1x32xf32>
    %23 = vector.broadcast %22 : vector<1x32xf32> to vector<16x32xf32>
    %24 = arith.addf %21, %23 : vector<16x32xf32>
    %25 = arith.truncf %24 : vector<16x32xf32> to vector<16x32xbf16>
    %c0_23 = arith.constant 0 : index
    %c0_24 = arith.constant 0 : index
    %26 = vector.load %arg13[%c0_23, %c0_24] : memref<16x32xbf16, #tpu.memory_space<vmem>>, vector<16x32xbf16>
    tpu.vector_store %arg13[%c0_23, %c0_24], %25 {strides = array<i32>} : memref<16x32xbf16, #tpu.memory_space<vmem>>, vector<16x32xbf16>,
    return
  }
  func.func @transform_0(%arg0: i32, %arg1: i32) -> (i32, i32) {
    %c0_i32 = arith.constant 0 : i32
    %c0_i32_0 = arith.constant 0 : i32
    return %arg0, %c0_i32 : i32, i32
  }
  func.func @transform_1(%arg0: i32, %arg1: i32) -> (i32, i32) {
    %c0_i32 = arith.constant 0 : i32
    %c0_i32_0 = arith.constant 0 : i32
    return %arg0, %c0_i32 : i32, i32
  }
  func.func @transform_2(%arg0: i32, %arg1: i32) -> (i32, i32) {
    %c0_i32 = arith.constant 0 : i32
    %c0_i32_0 = arith.constant 0 : i32
    return %arg0, %c0_i32 : i32, i32
  }
  func.func @transform_3(%arg0: i32, %arg1: i32) -> (i32, i32) {
    %c0_i32 = arith.constant 0 : i32
    %c0_i32_0 = arith.constant 0 : i32
    return %c0_i32, %arg1 : i32, i32
  }
  func.func @transform_4(%arg0: i32, %arg1: i32) -> (i32, i32) {
    %c0_i32 = arith.constant 0 : i32
    %c0_i32_0 = arith.constant 0 : i32
    return %c0_i32, %arg1 : i32, i32
  }
  func.func @transform_5(%arg0: i32, %arg1: i32) -> (i32, i32) {
    %c0_i32 = arith.constant 0 : i32
    %c0_i32_0 = arith.constant 0 : i32
    return %c0_i32, %arg1 : i32, i32
  }
  func.func @transform_6(%arg0: i32, %arg1: i32) -> (i32, i32) {
    %c0_i32 = arith.constant 0 : i32
    %c0_i32_0 = arith.constant 0 : i32
    return %c0_i32, %arg1 : i32, i32
  }
  func.func @transform_7(%arg0: i32, %arg1: i32) -> (i32, i32) {
    %c0_i32 = arith.constant 0 : i32
    %c0_i32_0 = arith.constant 0 : i32
    return %c0_i32, %arg1 : i32, i32
  }
  func.func @transform_8(%arg0: i32, %arg1: i32) -> (i32, i32) {
    %c0_i32 = arith.constant 0 : i32
    %c0_i32_0 = arith.constant 0 : i32
    return %c0_i32, %arg1 : i32, i32
  }
  func.func @transform_9(%arg0: i32, %arg1: i32) -> (i32, i32) {
    %c0_i32 = arith.constant 0 : i32
    return %arg0, %arg1 : i32, i32
  }
  func.func @transform_10(%arg0: i32, %arg1: i32) -> (i32, i32) {
    %c0_i32 = arith.constant 0 : i32
    return %arg0, %arg1 : i32, i32
  }
  func.func @transform_11(%arg0: i32, %arg1: i32) -> (i32, i32) {
    %c0_i32 = arith.constant 0 : i32
    return %arg0, %arg1 : i32, i32
  }
}

</mosaic_0001>

<llo_original>
// kernel: tpu_custom_call.1
$region0: #{tpu_custom_call.1}
  #allocation0 [shape = 'u32[]', space=smem, size = 0x4, offset = 0x4, fixed_abs, tag = 'smem constant byte address 0x4 - core index']
  #allocation1 [shape = 'u32[144,128]{1,0:T(1,128)}', space=vmem, size = 0x12000, scoped, tag = 'internal scratch']
  %s0 = inlined_call_operand.hbm [shape: f32[16,32], index: 0, kind: input, shape index: {}]
  %s1 = inlined_call_operand.hbm [shape: f32[16,32], index: 1, kind: input, shape index: {}]
  %s2 = inlined_call_operand.hbm [shape: f32[16,32], index: 2, kind: input, shape index: {}]
  %s3 = inlined_call_operand.hbm [shape: bf16[32,32], index: 3, kind: input, shape index: {}]
  %s4 = inlined_call_operand.vmem [shape: f32[1,32], index: 4, kind: input, shape index: {}]
  %s5 = inlined_call_operand.hbm [shape: bf16[32,32], index: 5, kind: input, shape index: {}]
  %s6 = inlined_call_operand.vmem [shape: f32[1,32], index: 6, kind: input, shape index: {}]
  %s7 = inlined_call_operand.hbm [shape: bf16[32,32], index: 7, kind: input, shape index: {}]
  %s8 = inlined_call_operand.vmem [shape: f32[1,32], index: 8, kind: input, shape index: {}]
  %s9 = inlined_call_operand.hbm [shape: bf16[16,32], index: 9, kind: output, shape index: {0}]
  %s10 = inlined_call_operand.hbm [shape: bf16[16,32], index: 10, kind: output, shape index: {1}]
  %s11 = inlined_call_operand.hbm [shape: bf16[16,32], index: 11, kind: output, shape index: {2}]
  %12 = xla_tuple %s9, %s10, %s11
  %s13 = sld [smem:[#allocation0]]
  $region86: #{tpu_custom_call.1} parent=0
    _
  %s15 = ssub.s32 1, %s13
  %s16 = scalar_select 0, %s15, %s13
  $region1: #{tpu_custom_call.1} parent=0
    #allocation2 [shape = 'u8[8192]{0}', space=vmem, size = 0x2000, scoped, tag = 'input window, operand 0, single buffered']
    #allocation3 [shape = 's32[1]{0}', space=sflag, size = 0x4, scoped, tag = 'scoped memory for tpu_custom_call.1']
    #allocation4 [shape = 's32[1]{0}', space=sflag, size = 0x4, scoped, tag = 'scoped memory for tpu_custom_call.1']
    #allocation5 [shape = 'u8[8192]{0}', space=vmem, size = 0x2000, scoped, tag = 'input window, operand 1, single buffered']
    #allocation6 [shape = 's32[1]{0}', space=sflag, size = 0x4, scoped, tag = 'scoped memory for tpu_custom_call.1']
    #allocation7 [shape = 'u8[8192]{0}', space=vmem, size = 0x2000, scoped, tag = 'input window, operand 2, single buffered']
    #allocation8 [shape = 'u8[8192]{0}', space=vmem, size = 0x2000, scoped, tag = 'input window, operand 3, single buffered']
    #allocation9 [shape = 's32[1]{0}', space=sflag, size = 0x4, scoped, tag = 'scoped memory for tpu_custom_call.1']
    #allocation10 [shape = 'u8[8192]{0}', space=vmem, size = 0x2000, scoped, tag = 'input window, operand 5, single buffered']
    #allocation11 [shape = 'u8[8192]{0}', space=vmem, size = 0x2000, scoped, tag = 'input window, operand 7, single buffered']
    #allocation12 [shape = 's32[1]{0}', space=sflag, size = 0x4, scoped, tag = 'scoped memory for tpu_custom_call.1']
    #allocation13 [shape = 'u8[4096]{0}', space=vmem, size = 0x1000, scoped, tag = 'output window, operand 0, single buffered']
    #allocation14 [shape = 'u8[4096]{0}', space=vmem, size = 0x1000, scoped, tag = 'output window, operand 1, single buffered']
    #allocation15 [shape = 's32[1]{0}', space=sflag, size = 0x4, scoped, tag = 'scoped memory for tpu_custom_call.1']
    #allocation16 [shape = 'u8[4096]{0}', space=vmem, size = 0x1000, scoped, tag = 'output window, operand 2, single buffered']
    %17 = vsyncpa [#allocation3], 0
    %18 = vsyncpa [#allocation6], 0
    %19 = vsyncpa [#allocation9], 0
    %20 = vsyncpa [#allocation12], 0
    %21 = vsyncpa [#allocation4], 0
    %22 = vsyncpa [#allocation15], 0
    // Predicated region
    $region2: #{tpu_custom_call.1} parent=1 // pred_check
      _
    $region3: #{tpu_custom_call.1} parent=1 // pred_check_branch
      %24 = sbr.rel (0) target = $region5
    $region4: #{tpu_custom_call.1} parent=1 // pred_region
      %s26 = ssub.s32 256, 256
      %27 = vsyncadd [#allocation3], %s26
      %s28 = sshll.u32 [#allocation2], 4
      %s29 = int_to_ptr.vmem [resolvable:$true] %s28
      %34 = dma.hbm_to_vmem [thread:$0]  %s0, 256, %s29, [#allocation3], 128, 128, 8
    $region5: #{tpu_custom_call.1} parent=1 // pred_fallthru
      _
    // Predicated region
    $region6: #{tpu_custom_call.1} parent=1 // pred_check
      _
    $region7: #{tpu_custom_call.1} parent=1 // pred_check_branch
      %36 = sbr.rel (0) target = $region9
    $region8: #{tpu_custom_call.1} parent=1 // pred_region
      %s38 = ssub.s32 256, 256
      %39 = vsyncadd [#allocation6], %s38
      %s40 = sshll.u32 [#allocation5], 4
      %s41 = int_to_ptr.vmem [resolvable:$true] %s40
      %46 = dma.hbm_to_vmem [thread:$0]  %s1, 256, %s41, [#allocation6], 128, 128, 8
    $region9: #{tpu_custom_call.1} parent=1 // pred_fallthru
      _
    // Predicated region
    $region10: #{tpu_custom_call.1} parent=1 // pred_check
      _
    $region11: #{tpu_custom_call.1} parent=1 // pred_check_branch
      %48 = sbr.rel (0) target = $region13
    $region12: #{tpu_custom_call.1} parent=1 // pred_region
      %s50 = ssub.s32 256, 256
      %51 = vsyncadd [#allocation6], %s50
      %s52 = sshll.u32 [#allocation7], 4
      %s53 = int_to_ptr.vmem [resolvable:$true] %s52
      %58 = dma.hbm_to_vmem [thread:$0]  %s2, 256, %s53, [#allocation6], 128, 128, 8
    $region13: #{tpu_custom_call.1} parent=1 // pred_fallthru
      _
    // Predicated region
    $region14: #{tpu_custom_call.1} parent=1 // pred_check
      _
    $region15: #{tpu_custom_call.1} parent=1 // pred_check_branch
      %60 = sbr.rel (0) target = $region17
    $region16: #{tpu_custom_call.1} parent=1 // pred_region
      %s62 = ssub.s32 256, 256
      %63 = vsyncadd [#allocation9], %s62
      %s64 = sshll.u32 [#allocation8], 4
      %s65 = int_to_ptr.vmem [resolvable:$true] %s64
      %70 = dma.hbm_to_vmem [thread:$0]  %s3, 256, %s65, [#allocation9], 64, 64, 4
    $region17: #{tpu_custom_call.1} parent=1 // pred_fallthru
      _
    // Predicated region
    $region18: #{tpu_custom_call.1} parent=1 // pred_check
      _
    $region19: #{tpu_custom_call.1} parent=1 // pred_check_branch
      %72 = sbr.rel (0) target = $region21
    $region20: #{tpu_custom_call.1} parent=1 // pred_region
      _
    $region21: #{tpu_custom_call.1} parent=1 // pred_fallthru
      _
    // Predicated region
    $region22: #{tpu_custom_call.1} parent=1 // pred_check
      _
    $region23: #{tpu_custom_call.1} parent=1 // pred_check_branch
      %74 = sbr.rel (0) target = $region25
    $region24: #{tpu_custom_call.1} parent=1 // pred_region
      %s76 = ssub.s32 256, 256
      %77 = vsyncadd [#allocation9], %s76
      %s78 = sshll.u32 [#allocation10], 4
      %s79 = int_to_ptr.vmem [resolvable:$true] %s78
      %84 = dma.hbm_to_vmem [thread:$0]  %s5, 256, %s79, [#allocation9], 64, 64, 4
    $region25: #{tpu_custom_call.1} parent=1 // pred_fallthru
      _
    // Predicated region
    $region26: #{tpu_custom_call.1} parent=1 // pred_check
      _
    $region27: #{tpu_custom_call.1} parent=1 // pred_check_branch
      %86 = sbr.rel (0) target = $region29
    $region28: #{tpu_custom_call.1} parent=1 // pred_region
      _
    $region29: #{tpu_custom_call.1} parent=1 // pred_fallthru
      _
    // Predicated region
    $region30: #{tpu_custom_call.1} parent=1 // pred_check
      _
    $region31: #{tpu_custom_call.1} parent=1 // pred_check_branch
      %88 = sbr.rel (0) target = $region33
    $region32: #{tpu_custom_call.1} parent=1 // pred_region
      %s90 = ssub.s32 256, 256
      %91 = vsyncadd [#allocation12], %s90
      %s92 = sshll.u32 [#allocation11], 4
      %s93 = int_to_ptr.vmem [resolvable:$true] %s92
      %98 = dma.hbm_to_vmem [thread:$0]  %s7, 256, %s93, [#allocation12], 64, 64, 4
    $region33: #{tpu_custom_call.1} parent=1 // pred_fallthru
      _
    // Predicated region
    $region34: #{tpu_custom_call.1} parent=1 // pred_check
      _
    $region35: #{tpu_custom_call.1} parent=1 // pred_check_branch
      %100 = sbr.rel (0) target = $region37
    $region36: #{tpu_custom_call.1} parent=1 // pred_region
      _
    $region37: #{tpu_custom_call.1} parent=1 // pred_fallthru
      _
    // Predicated region
    $region38: #{tpu_custom_call.1} parent=1 // pred_check
      _
    $region39: #{tpu_custom_call.1} parent=1 // pred_check_branch
      %102 = sbr.rel (0) target = $region41
    $region40: #{tpu_custom_call.1} parent=1 // pred_region
      %103 = dma.done [#allocation3], 256
    $region41: #{tpu_custom_call.1} parent=1 // pred_fallthru
      _
    // Predicated region
    $region42: #{tpu_custom_call.1} parent=1 // pred_check
      _
    $region43: #{tpu_custom_call.1} parent=1 // pred_check_branch
      %105 = sbr.rel (0) target = $region45
    $region44: #{tpu_custom_call.1} parent=1 // pred_region
      %106 = dma.done [#allocation6], 256
    $region45: #{tpu_custom_call.1} parent=1 // pred_fallthru
      _
    // Predicated region
    $region46: #{tpu_custom_call.1} parent=1 // pred_check
      _
    $region47: #{tpu_custom_call.1} parent=1 // pred_check_branch
      %108 = sbr.rel (0) target = $region49
    $region48: #{tpu_custom_call.1} parent=1 // pred_region
      %109 = dma.done [#allocation6], 256
    $region49: #{tpu_custom_call.1} parent=1 // pred_fallthru
      _
    // Predicated region
    $region50: #{tpu_custom_call.1} parent=1 // pred_check
      _
    $region51: #{tpu_custom_call.1} parent=1 // pred_check_branch
      %111 = sbr.rel (0) target = $region53
    $region52: #{tpu_custom_call.1} parent=1 // pred_region
      %112 = dma.done [#allocation9], 256
    $region53: #{tpu_custom_call.1} parent=1 // pred_fallthru
      _
    // Predicated region
    $region54: #{tpu_custom_call.1} parent=1 // pred_check
      _
    $region55: #{tpu_custom_call.1} parent=1 // pred_check_branch
      %114 = sbr.rel (0) target = $region57
    $region56: #{tpu_custom_call.1} parent=1 // pred_region
      %115 = dma.done [#allocation9], 256
    $region57: #{tpu_custom_call.1} parent=1 // pred_fallthru
      _
    // Predicated region
    $region58: #{tpu_custom_call.1} parent=1 // pred_check
      _
    $region59: #{tpu_custom_call.1} parent=1 // pred_check_branch
      %117 = sbr.rel (0) target = $region61
    $region60: #{tpu_custom_call.1} parent=1 // pred_region
      %118 = dma.done [#allocation12], 256
    $region61: #{tpu_custom_call.1} parent=1 // pred_fallthru
      _
    %v120 = vld [vmem:[#allocation2] sm:$0xff]
    %v121 = vld [vmem:[#allocation2 + $0x8] sm:$0xff]
    %v122 = vpack.c.bf16 %v121, %v120
    %v123 = vld [vmem:[#allocation8] sm:$0xf]
    %v124 = vld [vmem:[#allocation8 + $0x4] sm:$0xf]
    %v125 = vld [vmem:[#allocation8 + $0x8] sm:$0xf]
    %v126 = vld [vmem:[#allocation8 + $0xc] sm:$0xf]
    %v127 = vld [vmem:[%s4] sm:$0x1]
    %v129 = vlaneseq
    %v130 = vshrl.u32 %v129, 7
    %v131 = vsub.s32 0, %v130
    %v132 = vrot.slane %v127, %v131
    %v138 = vunpack.c.l.b16 %v123
    %v139 = vunpack.c.l.b16 %v124
    %v140 = vunpack.c.l.b16 %v125
    %v141 = vunpack.c.l.b16 %v126
    %v142 = vpack.c.b16 %v139, %v138
    %v143 = vpack.c.b16 %v141, %v140
    %vm146 = vcmask 261120
    %v148 = vsel %vm146, %v122, 0
    %150 = vmatprep.subr.bf16.mxu0 0
    %151 = vmatpush1.bf16.msra.mxu0 0
    %152 = vmatprep.subr.bf16.mxu0 0
    %153 = vmatpush1.bf16.msra.mxu0 0
    %154 = vmatprep.subr.bf16.mxu0 0
    %155 = vmatpush1.bf16.msra.mxu0 0
    %156 = vmatprep.subr.bf16.mxu0 0
    %157 = vmatpush1.bf16.msra.mxu0 0
    %158 = vmatprep.subr.bf16.mxu0 0
    %159 = vmatpush1.bf16.msra.mxu0 0
    %160 = vmatprep.subr.bf16.mxu0 0
    %161 = vmatpush1.bf16.msra.mxu0 0
    %162 = vmatprep.subr.bf16.mxu0 0
    %163 = vmatpush1.bf16.msra.mxu0 %v143
    %164 = vmatprep.subr.bf16.mxu0 0
    %165 = vmatpush1.bf16.msra.mxu0 %v142
    %166 = vmatprep.subr.bf16.mxu0 0
    %167 = vmatpush2.bf16.msra.mxu0 0
    %168 = vmatprep.subr.bf16.mxu0 0
    %169 = vmatpush2.bf16.msra.mxu0 0
    %170 = vmatprep.subr.bf16.mxu0 0
    %171 = vmatpush2.bf16.msra.mxu0 0
    %172 = vmatprep.subr.bf16.mxu0 0
    %173 = vmatpush2.bf16.msra.mxu0 0
    %174 = vmatprep.subr.bf16.mxu0 0
    %175 = vmatpush2.bf16.msra.mxu0 0
    %176 = vmatprep.subr.bf16.mxu0 0
    %177 = vmatpush2.bf16.msra.mxu0 0
    %178 = vmatprep.subr.bf16.mxu0 0
    %179 = vmatpush2.bf16.msra.mxu0 0
    %180 = vmatprep.subr.bf16.mxu0 0
    %181 = vmatpush2.bf16.msra.mxu0 0
    %182 = vmatprep.mubr.bf16.mxu0 0
    %183 = vmatmul.mubr.bf16.gmra.mxu0 %v148
    %v184 = vpop.f32.mrf.mxu0
    %v185 = vadd.f32 %v132, %v184
    %v186 = vpop.f32.mrf.mxu0
    %v187 = vpop.f32.mrf.mxu0
    %v188 = vadd.f32 %v132, %v187
    %v189 = vpop.f32.mrf.mxu0
    %190 = vdwg.mxu0
    %v191 = vpack.c.bf16 %v188, %v185
    %v193 = vunpack.c.l.b16 %v191
    %v194 = vunpack.c.h.b16 %v191
    %v195 = vpack.c.b16 %v193, %v193
    %v196 = vpack.c.b16 %v194, %v194
    %vm199 = vcmask 257024
    %200 = vst.msk [vmem:[#allocation13] sm:$0xf] %vm199, %v195
    %201 = vst.msk [vmem:[#allocation13 + $0x4] sm:$0xf] %vm199, %v196
    %v202 = vld [vmem:[#allocation5] sm:$0xff]
    %v203 = vld [vmem:[#allocation5 + $0x8] sm:$0xff]
    %v204 = vpack.c.bf16 %v203, %v202
    %v205 = vld [vmem:[#allocation10] sm:$0xf]
    %v206 = vld [vmem:[#allocation10 + $0x4] sm:$0xf]
    %v207 = vld [vmem:[#allocation10 + $0x8] sm:$0xf]
    %v208 = vld [vmem:[#allocation10 + $0xc] sm:$0xf]
    %v209 = vld [vmem:[%s6] sm:$0x1]
    %v211 = vlaneseq
    %v212 = vshrl.u32 %v211, 7
    %v213 = vsub.s32 0, %v212
    %v214 = vrot.slane %v209, %v213
    %v220 = vunpack.c.l.b16 %v205
    %v221 = vunpack.c.l.b16 %v206
    %v222 = vunpack.c.l.b16 %v207
    %v223 = vunpack.c.l.b16 %v208
    %v224 = vpack.c.b16 %v221, %v220
    %v225 = vpack.c.b16 %v223, %v222
    %v229 = vsel %vm146, %v204, 0
    %231 = vmatprep.subr.bf16.mxu0 0
    %232 = vmatpush1.bf16.msra.mxu0 0
    %233 = vmatprep.subr.bf16.mxu0 0
    %234 = vmatpush1.bf16.msra.mxu0 0
    %235 = vmatprep.subr.bf16.mxu0 0
    %236 = vmatpush1.bf16.msra.mxu0 0
    %237 = vmatprep.subr.bf16.mxu0 0
    %238 = vmatpush1.bf16.msra.mxu0 0
    %239 = vmatprep.subr.bf16.mxu0 0
    %240 = vmatpush1.bf16.msra.mxu0 0
    %241 = vmatprep.subr.bf16.mxu0 0
    %242 = vmatpush1.bf16.msra.mxu0 0
    %243 = vmatprep.subr.bf16.mxu0 0
    %244 = vmatpush1.bf16.msra.mxu0 %v225
    %245 = vmatprep.subr.bf16.mxu0 0
    %246 = vmatpush1.bf16.msra.mxu0 %v224
    %247 = vmatprep.subr.bf16.mxu0 0
    %248 = vmatpush2.bf16.msra.mxu0 0
    %249 = vmatprep.subr.bf16.mxu0 0
    %250 = vmatpush2.bf16.msra.mxu0 0
    %251 = vmatprep.subr.bf16.mxu0 0
    %252 = vmatpush2.bf16.msra.mxu0 0
    %253 = vmatprep.subr.bf16.mxu0 0
    %254 = vmatpush2.bf16.msra.mxu0 0
    %255 = vmatprep.subr.bf16.mxu0 0
    %256 = vmatpush2.bf16.msra.mxu0 0
    %257 = vmatprep.subr.bf16.mxu0 0
    %258 = vmatpush2.bf16.msra.mxu0 0
    %259 = vmatprep.subr.bf16.mxu0 0
    %260 = vmatpush2.bf16.msra.mxu0 0
    %261 = vmatprep.subr.bf16.mxu0 0
    %262 = vmatpush2.bf16.msra.mxu0 0
    %263 = vmatprep.mubr.bf16.mxu0 0
    %264 = vmatmul.mubr.bf16.gmra.mxu0 %v229
    %v265 = vpop.f32.mrf.mxu0
    %v266 = vadd.f32 %v214, %v265
    %v267 = vpop.f32.mrf.mxu0
    %v268 = vpop.f32.mrf.mxu0
    %v269 = vadd.f32 %v214, %v268
    %v270 = vpop.f32.mrf.mxu0
    %271 = vdwg.mxu0
    %v272 = vpack.c.bf16 %v269, %v266
    %v274 = vunpack.c.l.b16 %v272
    %v275 = vunpack.c.h.b16 %v272
    %v276 = vpack.c.b16 %v274, %v274
    %v277 = vpack.c.b16 %v275, %v275
    %280 = vst.msk [vmem:[#allocation14] sm:$0xf] %vm199, %v276
    %281 = vst.msk [vmem:[#allocation14 + $0x4] sm:$0xf] %vm199, %v277
    %v282 = vld [vmem:[#allocation7] sm:$0xff]
    %v283 = vld [vmem:[#allocation7 + $0x8] sm:$0xff]
    %v284 = vpack.c.bf16 %v283, %v282
    %v285 = vld [vmem:[#allocation11] sm:$0xf]
    %v286 = vld [vmem:[#allocation11 + $0x4] sm:$0xf]
    %v287 = vld [vmem:[#allocation11 + $0x8] sm:$0xf]
    %v288 = vld [vmem:[#allocation11 + $0xc] sm:$0xf]
    %v289 = vld [vmem:[%s8] sm:$0x1]
    %v291 = vlaneseq
    %v292 = vshrl.u32 %v291, 7
    %v293 = vsub.s32 0, %v292
    %v294 = vrot.slane %v289, %v293
    %v300 = vunpack.c.l.b16 %v285
    %v301 = vunpack.c.l.b16 %v286
    %v302 = vunpack.c.l.b16 %v287
    %v303 = vunpack.c.l.b16 %v288
    %v304 = vpack.c.b16 %v301, %v300
    %v305 = vpack.c.b16 %v303, %v302
    %v309 = vsel %vm146, %v284, 0
    %311 = vmatprep.subr.bf16.mxu0 0
    %312 = vmatpush1.bf16.msra.mxu0 0
    %313 = vmatprep.subr.bf16.mxu0 0
    %314 = vmatpush1.bf16.msra.mxu0 0
    %315 = vmatprep.subr.bf16.mxu0 0
    %316 = vmatpush1.bf16.msra.mxu0 0
    %317 = vmatprep.subr.bf16.mxu0 0
    %318 = vmatpush1.bf16.msra.mxu0 0
    %319 = vmatprep.subr.bf16.mxu0 0
    %320 = vmatpush1.bf16.msra.mxu0 0
    %321 = vmatprep.subr.bf16.mxu0 0
    %322 = vmatpush1.bf16.msra.mxu0 0
    %323 = vmatprep.subr.bf16.mxu0 0
    %324 = vmatpush1.bf16.msra.mxu0 %v305
    %325 = vmatprep.subr.bf16.mxu0 0
    %326 = vmatpush1.bf16.msra.mxu0 %v304
    %327 = vmatprep.subr.bf16.mxu0 0
    %328 = vmatpush2.bf16.msra.mxu0 0
    %329 = vmatprep.subr.bf16.mxu0 0
    %330 = vmatpush2.bf16.msra.mxu0 0
    %331 = vmatprep.subr.bf16.mxu0 0
    %332 = vmatpush2.bf16.msra.mxu0 0
    %333 = vmatprep.subr.bf16.mxu0 0
    %334 = vmatpush2.bf16.msra.mxu0 0
    %335 = vmatprep.subr.bf16.mxu0 0
    %336 = vmatpush2.bf16.msra.mxu0 0
    %337 = vmatprep.subr.bf16.mxu0 0
    %338 = vmatpush2.bf16.msra.mxu0 0
    %339 = vmatprep.subr.bf16.mxu0 0
    %340 = vmatpush2.bf16.msra.mxu0 0
    %341 = vmatprep.subr.bf16.mxu0 0
    %342 = vmatpush2.bf16.msra.mxu0 0
    %343 = vmatprep.mubr.bf16.mxu0 0
    %344 = vmatmul.mubr.bf16.gmra.mxu0 %v309
    %v345 = vpop.f32.mrf.mxu0
    %v346 = vadd.f32 %v294, %v345
    %v347 = vpop.f32.mrf.mxu0
    %v348 = vpop.f32.mrf.mxu0
    %v349 = vadd.f32 %v294, %v348
    %v350 = vpop.f32.mrf.mxu0
    %351 = vdwg.mxu0
    %v352 = vpack.c.bf16 %v349, %v346
    %v354 = vunpack.c.l.b16 %v352
    %v355 = vunpack.c.h.b16 %v352
    %v356 = vpack.c.b16 %v354, %v354
    %v357 = vpack.c.b16 %v355, %v355
    %360 = vst.msk [vmem:[#allocation16] sm:$0xf] %vm199, %v356
    %361 = vst.msk [vmem:[#allocation16 + $0x4] sm:$0xf] %vm199, %v357
    // Predicated region
    $region62: #{tpu_custom_call.1} parent=1 // pred_check
      _
    $region63: #{tpu_custom_call.1} parent=1 // pred_check_branch
      %363 = sbr.rel (0) target = $region65
    $region64: #{tpu_custom_call.1} parent=1 // pred_region
      %s365 = ssub.s32 128, 128
      %366 = vsyncadd [#allocation4], %s365
      %s367 = sshll.u32 [#allocation13], 4
      %s368 = int_to_ptr.vmem [resolvable:$true] %s367
      %373 = dma.vmem_to_hbm [thread:$0]  %s368, 128, %s9, [#allocation4], 64, 64, 4
    $region65: #{tpu_custom_call.1} parent=1 // pred_fallthru
      _
    // Predicated region
    $region66: #{tpu_custom_call.1} parent=1 // pred_check
      _
    $region67: #{tpu_custom_call.1} parent=1 // pred_check_branch
      %375 = sbr.rel (0) target = $region69
    $region68: #{tpu_custom_call.1} parent=1 // pred_region
      %s377 = ssub.s32 128, 128
      %378 = vsyncadd [#allocation15], %s377
      %s379 = sshll.u32 [#allocation14], 4
      %s380 = int_to_ptr.vmem [resolvable:$true] %s379
      %385 = dma.vmem_to_hbm [thread:$0]  %s380, 128, %s10, [#allocation15], 64, 64, 4
    $region69: #{tpu_custom_call.1} parent=1 // pred_fallthru
      _
    // Predicated region
    $region70: #{tpu_custom_call.1} parent=1 // pred_check
      _
    $region71: #{tpu_custom_call.1} parent=1 // pred_check_branch
      %387 = sbr.rel (0) target = $region73
    $region72: #{tpu_custom_call.1} parent=1 // pred_region
      %s389 = ssub.s32 128, 128
      %390 = vsyncadd [#allocation15], %s389
      %s391 = sshll.u32 [#allocation16], 4
      %s392 = int_to_ptr.vmem [resolvable:$true] %s391
      %397 = dma.vmem_to_hbm [thread:$0]  %s392, 128, %s11, [#allocation15], 64, 64, 4
    $region73: #{tpu_custom_call.1} parent=1 // pred_fallthru
      _
    // Predicated region
    $region74: #{tpu_custom_call.1} parent=1 // pred_check
      _
    $region75: #{tpu_custom_call.1} parent=1 // pred_check_branch
      %399 = sbr.rel (0) target = $region77
    $region76: #{tpu_custom_call.1} parent=1 // pred_region
      %400 = dma.done [#allocation4], 128
    $region77: #{tpu_custom_call.1} parent=1 // pred_fallthru
      _
    // Predicated region
    $region78: #{tpu_custom_call.1} parent=1 // pred_check
      _
    $region79: #{tpu_custom_call.1} parent=1 // pred_check_branch
      %402 = sbr.rel (0) target = $region81
    $region80: #{tpu_custom_call.1} parent=1 // pred_region
      %403 = dma.done [#allocation15], 128
    $region81: #{tpu_custom_call.1} parent=1 // pred_fallthru
      _
    // Predicated region
    $region82: #{tpu_custom_call.1} parent=1 // pred_check
      _
    $region83: #{tpu_custom_call.1} parent=1 // pred_check_branch
      %405 = sbr.rel (0) target = $region85
    $region84: #{tpu_custom_call.1} parent=1 // pred_region
      %406 = dma.done [#allocation15], 128
    $region85: #{tpu_custom_call.1} parent=1 // pred_fallthru
      _
    %407 = vsyncpa [#allocation3], 1
    %408 = vsyncpa [#allocation6], 1
    %409 = vsyncpa [#allocation9], 1
    %410 = vsyncpa [#allocation12], 1
    %411 = vsyncpa [#allocation4], 1
    %412 = vsyncpa [#allocation15], 1

</llo_original>
